<compile_context>
chip_gen: v5e
topology: v5e:2x2
jax: 0.10.0
libtpu: 0.0.40
codegen_flags: <defaults>
</compile_context>

<pallas_src>
import math

import jax
import jax.numpy as jnp
import numpy as np
from jax import lax
from jax.experimental import pallas as pl
from jax.experimental.pallas import tpu as pltpu

EMBED_DIM = 256                       # self.embed_dim in CADA
_NORM_EPS = 1e-12                     # torch F.normalize-style epsilon
_LABEL_EPS = 1e-8                     # epsilon used by the PyTorch module
_LOG_LABEL_EPS = float(math.log(_LABEL_EPS))


# ----------------------------------------------------------------------------
# Fused kernel: vision_proj + text_proj + ndf_loss (world_size == 1)
# ----------------------------------------------------------------------------
def _cada_fused_kernel(img_ref, txt_ref, wv_ref, bv_ref, wt_ref, bt_ref,
                       idx_row_ref, idx_col_ref, scale_ref, o_ref):
    # Contract the feature axis of x (bs, din) with the feature axis of the
    # untransposed nn.Linear weight (dout, din)  ->  x @ W.T on the MXU.
    dn = (((1,), (1,)), ((), ()))

    def proj(x_ref, w_ref, b_ref):
        y = lax.dot_general(
            x_ref[...].astype(jnp.bfloat16),
            w_ref[...],                               # weights already bf16
            dimension_numbers=dn,
            preferred_element_type=jnp.float32,       # f32 accumulation
        )
        return y + b_ref[...]                         # bias add in f32

    img = proj(img_ref, wv_ref, bv_ref)               # (bs, E) f32
    txt = proj(txt_ref, wt_ref, bt_ref)               # (bs, E) f32

    # logit_scale read from SMEM (learnable in the real model, not baked in).
    scale = scale_ref[0, 0]

    # L2 normalization via EUP rsqrt; fold logit_scale into the image-branch
    # per-row scale so the (bs,bs) logits never need an extra VALU multiply.
    img_n = img * (scale * lax.rsqrt(
        jnp.sum(img * img, axis=-1, keepdims=True) + _NORM_EPS))
    txt_n = txt * lax.rsqrt(
        jnp.sum(txt * txt, axis=-1, keepdims=True) + _NORM_EPS)

    # logits_per_image = logit_scale * img_n @ txt_n.T  (bf16 operands, f32 acc;
    # the scale is already inside img_n).
    logits = lax.dot_general(
        img_n.astype(jnp.bfloat16), txt_n.astype(jnp.bfloat16),
        dimension_numbers=dn, preferred_element_type=jnp.float32)  # (bs, bs)

    # --- soft labels built in-kernel from idx (no bs^2 HBM array, no bs^2 log)
    eq = idx_row_ref[...] == idx_col_ref[...]          # (bs, bs) bool
    eq_f = eq.astype(jnp.float32)
    count = jnp.sum(eq_f, axis=1, keepdims=True)       # (bs, 1) group sizes
    inv_count = 1.0 / count
    # eq is an equivalence relation -> row count == torch's column count on
    # every eq==1 entry, so labels matches torch's `labels / labels.sum(dim=1)`.
    labels = eq_f * inv_count
    log_labels = jnp.where(eq, jnp.log(inv_count + _LABEL_EPS), _LOG_LABEL_EPS)

    bs = eq_f.shape[0]
    inv_bs = 1.0 / bs

    # Image branch: row-wise log-softmax.  Reuse exp() for both the log-softmax
    # denominator and the softmax itself (no second bs^2 transcendental).
    sr = logits - jnp.max(logits, axis=1, keepdims=True)
    e_r = jnp.exp(sr)
    den_r = jnp.sum(e_r, axis=1, keepdims=True)
    lsm_r = sr - jnp.log(den_r)
    sm_r = e_r * pl.reciprocal(den_r, approx=True)

    # Text branch: log-softmax of logits.T == column-wise log-softmax of logits
    # (no explicit (bs,bs) transpose / extra VMEM temporary).
    sc = logits - jnp.max(logits, axis=0, keepdims=True)
    e_c = jnp.exp(sc)
    den_c = jnp.sum(e_c, axis=0, keepdims=True)
    lsm_c = sc - jnp.log(den_c)
    sm_c = e_c * pl.reciprocal(den_c, approx=True)

    # Soft-target cross entropies (mean over batch rows); labels is symmetric,
    # so the text-branch CE can be written against the column log-softmax.
    ce_i = -jnp.sum(labels * lsm_r) * inv_bs
    ce_t = -jnp.sum(labels * lsm_c) * inv_bs

    # Mean over all bs*bs elements of the per-element KL-style terms + CE.
    loss_i = jnp.mean(sm_r * (lsm_r - log_labels)
                      + labels * (log_labels - lsm_r)) + ce_i
    loss_t = jnp.mean(sm_c * (lsm_c - log_labels)
                      + labels * (log_labels - lsm_c)) + ce_t

    # Scalar result goes to SMEM (scalar path).
    o_ref[0, 0] = 0.5 * (loss_i + loss_t)


# ----------------------------------------------------------------------------
# CADA "forward" (implemented part): projections + global (ndf) loss
# ----------------------------------------------------------------------------
@jax.jit
def cada_global_forward(image_cls, text_cls, idx, params):
    bs, dv = image_cls.shape
    dt = text_cls.shape[1]
    e = params["w_v"].shape[0]

    idx32 = idx.astype(jnp.int32)
    idx_row = idx32.reshape(1, bs)                     # lane-dense
    idx_col = idx32.reshape(bs, 1)
    scale = jnp.asarray(params["logit_scale"], jnp.float32).reshape(1, 1)
    b_v = params["b_v"].reshape(1, e).astype(jnp.float32)
    b_t = params["b_t"].reshape(1, e).astype(jnp.float32)

    # Advisory cost estimate + VMEM budget from the static shapes.
    flops = 2 * bs * e * (dv + dt) + 2 * bs * bs * e + 24 * bs * bs
    transcendentals = 2 * bs * bs + 8 * bs
    bytes_in = (image_cls.size * image_cls.dtype.itemsize
                + text_cls.size * text_cls.dtype.itemsize
                + params["w_v"].size * 2 + params["w_t"].size * 2
                + 2 * e * 4 + 2 * bs * 4 + 4)
    cost = pl.CostEstimate(flops=flops, transcendentals=transcendentals,
                           bytes_accessed=bytes_in + 4)
    # ~6 live (bs,bs) f32 temporaries + a handful of (bs,E) f32 temporaries,
    # plus double-buffered inputs; clamp to a sane range.
    work_bytes = 4 * (6 * bs * bs + 6 * bs * e) + 2 * bytes_in
    vmem_limit = int(min(max(2 * work_bytes, 8 << 20), 100 << 20))

    vmem = pltpu.MemorySpace.VMEM
    smem = pltpu.MemorySpace.SMEM

    out = pl.pallas_call(
        _cada_fused_kernel,
        out_shape=jax.ShapeDtypeStruct((1, 1), jnp.float32),
        # No grid: a single invocation; all operands fit VMEM at these shapes.
        in_specs=[
            pl.BlockSpec(memory_space=vmem),   # image_cls  (bs, dv)  f32
            pl.BlockSpec(memory_space=vmem),   # text_cls   (bs, dt)  f32
            pl.BlockSpec(memory_space=vmem),   # w_v        (E, dv)   bf16
            pl.BlockSpec(memory_space=vmem),   # b_v        (1, E)    f32
            pl.BlockSpec(memory_space=vmem),   # w_t        (E, dt)   bf16
            pl.BlockSpec(memory_space=vmem),   # b_t        (1, E)    f32
            pl.BlockSpec(memory_space=vmem),   # idx_row    (1, bs)   i32
            pl.BlockSpec(memory_space=vmem),   # idx_col    (bs, 1)   i32
            pl.BlockSpec(memory_space=smem),   # logit_scale (1, 1)   f32
        ],
        out_specs=pl.BlockSpec(memory_space=smem),
        compiler_params=pltpu.CompilerParams(vmem_limit_bytes=vmem_limit),
        cost_estimate=cost,
    )(image_cls, text_cls, params["w_v"], b_v, params["w_t"], b_t,
      idx_row, idx_col, scale)
    return out[0, 0]


# ----------------------------------------------------------------------------
# Pure-JAX reference (mirrors the PyTorch math with the kernel's precision
# policy: bf16 MXU operands / weights, logit_scale folded into img_n, f32
# accumulation and f32 elementwise epilogue).
# ----------------------------------------------------------------------------
def _reference(image_cls, text_cls, idx, params):
    def proj(x, w, b):
        return jnp.dot(x.astype(jnp.bfloat16), w.T,
                       preferred_element_type=jnp.float32) + b

    image_feats = proj(image_cls, params["w_v"], params["b_v"])
    text_feats = proj(text_cls, params["w_t"], params["b_t"])
    bs = image_feats.shape[0]
    scale = jnp.asarray(params["logit_scale"], jnp.float32)

    labels = idx.reshape(-1, bs)
    labels = (labels == labels.T).astype(jnp.float32)
    labels = labels / jnp.sum(labels, axis=1)          # torch-style broadcast

    img_n = image_feats * (scale * lax.rsqrt(
        jnp.sum(image_feats * image_feats, axis=-1, keepdims=True) + _NORM_EPS))
    txt_n = text_feats * lax.rsqrt(
        jnp.sum(text_feats * text_feats, axis=-1, keepdims=True) + _NORM_EPS)

    li = jnp.dot(img_n.astype(jnp.bfloat16), txt_n.astype(jnp.bfloat16).T,
                 preferred_element_type=jnp.float32)
    lt = li.T

    def lsm(x):
        return x - jax.scipy.special.logsumexp(x, axis=1, keepdims=True)

    def branch(lg):
        l = lsm(lg)
        s = jnp.exp(l)
        ce = jnp.mean(-jnp.sum(labels * l, axis=1))
        m = (s * (l - jnp.log(labels + _LABEL_EPS))
             + labels * (jnp.log(labels + _LABEL_EPS) - l) + ce)
        return jnp.mean(m)

    return (branch(li) + branch(lt)) * 0.5


if __name__ == "__main__":
    bs = 8
    vision_width = 128   # scaled-down ViT-base width (768 in the real model)
    text_width = 128     # scaled-down BERT hidden size

    key = jax.random.PRNGKey(0)
    k1, k2, k3, k4, k5, k6 = jax.random.split(key, 6)

    # CLS-token features coming out of the (not-implemented) encoders.
    image_cls = jax.random.normal(k1, (bs, vision_width), dtype=jnp.float32)
    text_cls = jax.random.normal(k2, (bs, text_width), dtype=jnp.float32)
    # person-id labels with duplicates (positives share an id)
    idx = jnp.array([0, 0, 1, 2, 2, 2, 3, 4], dtype=jnp.int32)

    params = {
        # Projection weights stored/passed as bf16: halves the dominant weight
        # DMA at real widths and removes in-kernel casts on the weight operands.
        "w_v": (0.02 * jax.random.normal(k3, (EMBED_DIM, vision_width),
                                         jnp.float32)).astype(jnp.bfloat16),
        "b_v": 0.01 * jax.random.normal(k4, (EMBED_DIM,), jnp.float32),
        "w_t": (0.02 * jax.random.normal(k5, (EMBED_DIM, text_width),
                                         jnp.float32)).astype(jnp.bfloat16),
        "b_t": 0.01 * jax.random.normal(k6, (EMBED_DIM,), jnp.float32),
        # Learnable scalar in the real model (self.logit_scale = 1/0.02).
        "logit_scale": jnp.asarray(1.0 / 0.02, dtype=jnp.float32),
    }

    global_loss = jax.block_until_ready(
        cada_global_forward(image_cls, text_cls, idx, params))

    ref = jax.block_until_ready(_reference(image_cls, text_cls, idx, params))
    assert np.allclose(np.asarray(global_loss), np.asarray(ref),
                       rtol=1e-3, atol=1e-3), (float(global_loss), float(ref))

    print("KERNEL_OK")
</pallas_src>

<mosaic_0001>
module attributes {stable_mosaic.version = 11 : i64} {
  func.func @_cada_fused_kernel(%arg0: memref<8x128xf32, #tpu.memory_space<vmem>>, %arg1: memref<8x128xf32, #tpu.memory_space<vmem>>, %arg2: memref<256x128xbf16, #tpu.memory_space<vmem>>, %arg3: memref<1x256xf32, #tpu.memory_space<vmem>>, %arg4: memref<256x128xbf16, #tpu.memory_space<vmem>>, %arg5: memref<1x256xf32, #tpu.memory_space<vmem>>, %arg6: memref<1x8xi32, #tpu.memory_space<vmem>>, %arg7: memref<8x1xi32, #tpu.memory_space<vmem>>, %arg8: memref<1x1xf32, #tpu.memory_space<smem>>, %arg9: memref<1x1xf32, #tpu.memory_space<smem>>) attributes {dimension_semantics = [], scalar_prefetch = 0 : i64, scratch_operands = 0 : i64, tpu.core_type = #tpu.core_type<tc>} {
    %c0 = arith.constant 0 : index
    %c0_0 = arith.constant 0 : index
    %0 = vector.load %arg0[%c0, %c0_0] : memref<8x128xf32, #tpu.memory_space<vmem>>, vector<8x128xf32>
    %1 = arith.truncf %0 : vector<8x128xf32> to vector<8x128xbf16>
    %c0_1 = arith.constant 0 : index
    %c0_2 = arith.constant 0 : index
    %2 = vector.load %arg2[%c0_1, %c0_2] : memref<256x128xbf16, #tpu.memory_space<vmem>>, vector<256x128xbf16>
    %cst = arith.constant dense<0.000000e+00> : vector<8x256xf32>
    %3 = tpu.matmul %1, %2, %cst {dimension_numbers = #tpu.dot_dimension_numbers<[1], [1], [0], [0], [0, 0, 1, 0], [], []>} : vector<8x128xbf16>, vector<256x128xbf16>, vector<8x256xf32> -> vector<8x256xf32>
    %c0_3 = arith.constant 0 : index
    %c0_4 = arith.constant 0 : index
    %4 = vector.load %arg3[%c0_3, %c0_4] : memref<1x256xf32, #tpu.memory_space<vmem>>, vector<1x256xf32>
    %5 = vector.broadcast %4 : vector<1x256xf32> to vector<8x256xf32>
    %6 = arith.addf %3, %5 : vector<8x256xf32>
    %c0_5 = arith.constant 0 : index
    %c0_6 = arith.constant 0 : index
    %7 = vector.load %arg1[%c0_5, %c0_6] : memref<8x128xf32, #tpu.memory_space<vmem>>, vector<8x128xf32>
    %8 = arith.truncf %7 : vector<8x128xf32> to vector<8x128xbf16>
    %c0_7 = arith.constant 0 : index
    %c0_8 = arith.constant 0 : index
    %9 = vector.load %arg4[%c0_7, %c0_8] : memref<256x128xbf16, #tpu.memory_space<vmem>>, vector<256x128xbf16>
    %cst_9 = arith.constant dense<0.000000e+00> : vector<8x256xf32>
    %10 = tpu.matmul %8, %9, %cst_9 {dimension_numbers = #tpu.dot_dimension_numbers<[1], [1], [0], [0], [0, 0, 1, 0], [], []>} : vector<8x128xbf16>, vector<256x128xbf16>, vector<8x256xf32> -> vector<8x256xf32>
    %c0_10 = arith.constant 0 : index
    %c0_11 = arith.constant 0 : index
    %11 = vector.load %arg5[%c0_10, %c0_11] : memref<1x256xf32, #tpu.memory_space<vmem>>, vector<1x256xf32>
    %12 = vector.broadcast %11 : vector<1x256xf32> to vector<8x256xf32>
    %13 = arith.addf %10, %12 : vector<8x256xf32>
    %c0_12 = arith.constant 0 : index
    %c0_13 = arith.constant 0 : index
    %14 = memref.load %arg8[%c0_12, %c0_13] : memref<1x1xf32, #tpu.memory_space<smem>>
    %15 = arith.mulf %6, %6 : vector<8x256xf32>
    %cst_14 = arith.constant dense<0.000000e+00> : vector<8xf32>
    %16 = vector.multi_reduction <add>, %15, %cst_14 [1] : vector<8x256xf32> to vector<8xf32>
    %17 = vector.shape_cast %16 : vector<8xf32> to vector<8x1xf32>
    %cst_15 = arith.constant 9.99999996E-13 : f32
    %18 = vector.broadcast %cst_15 : f32 to vector<8x1xf32>
    %19 = arith.addf %17, %18 : vector<8x1xf32>
    %20 = math.rsqrt %19 : vector<8x1xf32>
    %21 = vector.broadcast %14 : f32 to vector<8x1xf32>
    %22 = arith.mulf %21, %20 : vector<8x1xf32>
    %23 = vector.broadcast %22 : vector<8x1xf32> to vector<8x256xf32>
    %24 = arith.mulf %6, %23 : vector<8x256xf32>
    %25 = arith.mulf %13, %13 : vector<8x256xf32>
    %cst_16 = arith.constant dense<0.000000e+00> : vector<8xf32>
    %26 = vector.multi_reduction <add>, %25, %cst_16 [1] : vector<8x256xf32> to vector<8xf32>
    %27 = vector.shape_cast %26 : vector<8xf32> to vector<8x1xf32>
    %cst_17 = arith.constant 9.99999996E-13 : f32
    %28 = vector.broadcast %cst_17 : f32 to vector<8x1xf32>
    %29 = arith.addf %27, %28 : vector<8x1xf32>
    %30 = math.rsqrt %29 : vector<8x1xf32>
    %31 = vector.broadcast %30 : vector<8x1xf32> to vector<8x256xf32>
    %32 = arith.mulf %13, %31 : vector<8x256xf32>
    %33 = arith.truncf %24 : vector<8x256xf32> to vector<8x256xbf16>
    %34 = arith.truncf %32 : vector<8x256xf32> to vector<8x256xbf16>
    %cst_18 = arith.constant dense<0.000000e+00> : vector<8x8xf32>
    %35 = tpu.matmul %33, %34, %cst_18 {dimension_numbers = #tpu.dot_dimension_numbers<[1], [1], [0], [0], [0, 0, 1, 0], [], []>} : vector<8x256xbf16>, vector<8x256xbf16>, vector<8x8xf32> -> vector<8x8xf32>
    %c0_19 = arith.constant 0 : index
    %c0_20 = arith.constant 0 : index
    %36 = vector.load %arg6[%c0_19, %c0_20] : memref<1x8xi32, #tpu.memory_space<vmem>>, vector<1x8xi32>
    %c0_21 = arith.constant 0 : index
    %c0_22 = arith.constant 0 : index
    %37 = vector.load %arg7[%c0_21, %c0_22] : memref<8x1xi32, #tpu.memory_space<vmem>>, vector<8x1xi32>
    %38 = vector.broadcast %36 : vector<1x8xi32> to vector<8x8xi32>
    %39 = vector.broadcast %37 : vector<8x1xi32> to vector<8x8xi32>
    %40 = arith.cmpi eq, %38, %39 : vector<8x8xi32>
    %41 = arith.extui %40 : vector<8x8xi1> to vector<8x8xi32>
    %42 = arith.sitofp %41 : vector<8x8xi32> to vector<8x8xf32>
    %cst_23 = arith.constant dense<0.000000e+00> : vector<8xf32>
    %43 = vector.multi_reduction <add>, %42, %cst_23 [1] : vector<8x8xf32> to vector<8xf32>
    %44 = vector.shape_cast %43 : vector<8xf32> to vector<8x1xf32>
    %cst_24 = arith.constant 1.000000e+00 : f32
    %45 = vector.broadcast %cst_24 : f32 to vector<8x1xf32>
    %46 = arith.divf %45, %44 : vector<8x1xf32>
    %47 = vector.broadcast %46 : vector<8x1xf32> to vector<8x8xf32>
    %48 = arith.mulf %42, %47 : vector<8x8xf32>
    %cst_25 = arith.constant 9.99999993E-9 : f32
    %49 = vector.broadcast %cst_25 : f32 to vector<8x1xf32>
    %50 = arith.addf %46, %49 : vector<8x1xf32>
    %51 = math.log %50 : vector<8x1xf32>
    %cst_26 = arith.constant -18.420681 : f32
    %52 = vector.shape_cast %51 : vector<8x1xf32> to vector<8x1xf32>
    %53 = vector.broadcast %52 : vector<8x1xf32> to vector<8x8xf32>
    %54 = vector.broadcast %cst_26 : f32 to vector<8x8xf32>
    %55 = arith.select %40, %53, %54 : vector<8x8xi1>, vector<8x8xf32>
    %cst_27 = arith.constant dense<0xFF800000> : vector<8xf32>
    %56 = vector.multi_reduction <maximumf>, %35, %cst_27 [1] : vector<8x8xf32> to vector<8xf32>
    %57 = vector.shape_cast %56 : vector<8xf32> to vector<8x1xf32>
    %58 = vector.broadcast %57 : vector<8x1xf32> to vector<8x8xf32>
    %59 = arith.subf %35, %58 : vector<8x8xf32>
    %60 = math.exp %59 : vector<8x8xf32>
    %cst_28 = arith.constant dense<0.000000e+00> : vector<8xf32>
    %61 = vector.multi_reduction <add>, %60, %cst_28 [1] : vector<8x8xf32> to vector<8xf32>
    %62 = vector.shape_cast %61 : vector<8xf32> to vector<8x1xf32>
    %63 = math.log %62 : vector<8x1xf32>
    %64 = vector.broadcast %63 : vector<8x1xf32> to vector<8x8xf32>
    %65 = arith.subf %59, %64 : vector<8x8xf32>
    %66 = tpu.reciprocal %62 {approx = true} : vector<8x1xf32> -> vector<8x1xf32>
    %67 = vector.broadcast %66 : vector<8x1xf32> to vector<8x8xf32>
    %68 = arith.mulf %60, %67 : vector<8x8xf32>
    %cst_29 = arith.constant dense<0xFF800000> : vector<8xf32>
    %69 = vector.multi_reduction <maximumf>, %35, %cst_29 [0] : vector<8x8xf32> to vector<8xf32>
    %70 = vector.shape_cast %69 : vector<8xf32> to vector<1x8xf32>
    %71 = vector.broadcast %70 : vector<1x8xf32> to vector<8x8xf32>
    %72 = arith.subf %35, %71 : vector<8x8xf32>
    %73 = math.exp %72 : vector<8x8xf32>
    %cst_30 = arith.constant dense<0.000000e+00> : vector<8xf32>
    %74 = vector.multi_reduction <add>, %73, %cst_30 [0] : vector<8x8xf32> to vector<8xf32>
    %75 = vector.shape_cast %74 : vector<8xf32> to vector<1x8xf32>
    %76 = math.log %75 : vector<1x8xf32>
    %77 = vector.broadcast %76 : vector<1x8xf32> to vector<8x8xf32>
    %78 = arith.subf %72, %77 : vector<8x8xf32>
    %79 = tpu.reciprocal %75 {approx = true} : vector<1x8xf32> -> vector<1x8xf32>
    %80 = vector.broadcast %79 : vector<1x8xf32> to vector<8x8xf32>
    %81 = arith.mulf %73, %80 : vector<8x8xf32>
    %82 = arith.mulf %48, %65 : vector<8x8xf32>
    %83 = vector.shape_cast %82 : vector<8x8xf32> to vector<1x8x8xf32>
    %cst_31 = arith.constant dense<0.000000e+00> : vector<1xf32>
    %84 = vector.multi_reduction <add>, %83, %cst_31 [1, 2] : vector<1x8x8xf32> to vector<1xf32>
    %85 = vector.shape_cast %84 : vector<1xf32> to vector<1x1x1xf32>
    %86 = vector.extract %85[0, 0, 0] : f32 from vector<1x1x1xf32>
    %cst_32 = arith.constant 0.000000e+00 : f32
    %87 = arith.subf %cst_32, %86 : f32
    %cst_33 = arith.constant 1.250000e-01 : f32
    %88 = arith.mulf %87, %cst_33 : f32
    %89 = arith.mulf %48, %78 : vector<8x8xf32>
    %90 = vector.shape_cast %89 : vector<8x8xf32> to vector<1x8x8xf32>
    %cst_34 = arith.constant dense<0.000000e+00> : vector<1xf32>
    %91 = vector.multi_reduction <add>, %90, %cst_34 [1, 2] : vector<1x8x8xf32> to vector<1xf32>
    %92 = vector.shape_cast %91 : vector<1xf32> to vector<1x1x1xf32>
    %93 = vector.extract %92[0, 0, 0] : f32 from vector<1x1x1xf32>
    %cst_35 = arith.constant 0.000000e+00 : f32
    %94 = arith.subf %cst_35, %93 : f32
    %cst_36 = arith.constant 1.250000e-01 : f32
    %95 = arith.mulf %94, %cst_36 : f32
    %96 = arith.subf %65, %55 : vector<8x8xf32>
    %97 = arith.mulf %68, %96 : vector<8x8xf32>
    %98 = arith.subf %55, %65 : vector<8x8xf32>
    %99 = arith.mulf %48, %98 : vector<8x8xf32>
    %100 = arith.addf %97, %99 : vector<8x8xf32>
    %101 = vector.shape_cast %100 : vector<8x8xf32> to vector<1x8x8xf32>
    %cst_37 = arith.constant dense<0.000000e+00> : vector<1xf32>
    %102 = vector.multi_reduction <add>, %101, %cst_37 [1, 2] : vector<1x8x8xf32> to vector<1xf32>
    %103 = vector.shape_cast %102 : vector<1xf32> to vector<1x1x1xf32>
    %104 = vector.extract %103[0, 0, 0] : f32 from vector<1x1x1xf32>
    %cst_38 = arith.constant 6.400000e+01 : f32
    %105 = arith.divf %104, %cst_38 : f32
    %106 = arith.addf %105, %88 : f32
    %107 = arith.subf %78, %55 : vector<8x8xf32>
    %108 = arith.mulf %81, %107 : vector<8x8xf32>
    %109 = arith.subf %55, %78 : vector<8x8xf32>
    %110 = arith.mulf %48, %109 : vector<8x8xf32>
    %111 = arith.addf %108, %110 : vector<8x8xf32>
    %112 = vector.shape_cast %111 : vector<8x8xf32> to vector<1x8x8xf32>
    %cst_39 = arith.constant dense<0.000000e+00> : vector<1xf32>
    %113 = vector.multi_reduction <add>, %112, %cst_39 [1, 2] : vector<1x8x8xf32> to vector<1xf32>
    %114 = vector.shape_cast %113 : vector<1xf32> to vector<1x1x1xf32>
    %115 = vector.extract %114[0, 0, 0] : f32 from vector<1x1x1xf32>
    %cst_40 = arith.constant 6.400000e+01 : f32
    %116 = arith.divf %115, %cst_40 : f32
    %117 = arith.addf %116, %95 : f32
    %118 = arith.addf %106, %117 : f32
    %cst_41 = arith.constant 5.000000e-01 : f32
    %119 = arith.mulf %cst_41, %118 : f32
    %c0_42 = arith.constant 0 : index
    %c0_43 = arith.constant 0 : index
    %120 = memref.load %arg9[%c0_42, %c0_43] : memref<1x1xf32, #tpu.memory_space<smem>>
    memref.store %119, %arg9[%c0_42, %c0_43] : memref<1x1xf32, #tpu.memory_space<smem>>
    return
  }
}

</mosaic_0001>

<llo_original>
// kernel: cada_global_forward.1
$region0: #{cada_global_forward.1}
  #allocation0 [shape = 'u32[]', space=smem, size = 0x4, offset = 0x4, fixed_abs, tag = 'smem constant byte address 0x4 - core index']
  #allocation1 [shape = 'u32[72,128]{1,0:T(1,128)}', space=vmem, size = 0x9000, scoped, tag = 'internal scratch']
  #allocation2 [shape = 'f32[1,1]{1,0:T(1,128)S(6)}', space=smem, size = 0x200, scoped, tag = 'scoped memory for cada_global_forward.1']
  %s0 = inlined_call_operand.vmem [shape: f32[8,128], index: 0, kind: input, shape index: {}]
  %s1 = inlined_call_operand.vmem [shape: f32[8,128], index: 1, kind: input, shape index: {}]
  %s2 = inlined_call_operand.hbm [shape: bf16[256,128], index: 2, kind: input, shape index: {}]
  %s3 = inlined_call_operand.hbm [shape: f32[1,256], index: 3, kind: input, shape index: {}]
  %s4 = inlined_call_operand.hbm [shape: bf16[256,128], index: 4, kind: input, shape index: {}]
  %s5 = inlined_call_operand.hbm [shape: f32[1,256], index: 5, kind: input, shape index: {}]
  %s6 = inlined_call_operand.vmem [shape: s32[1,8], index: 6, kind: input, shape index: {}]
  %s7 = inlined_call_operand.vmem [shape: s32[8,1], index: 7, kind: input, shape index: {}]
  %s8 = inlined_call_operand.<no memory space> [shape: f32[1,1], index: 8, kind: input, shape index: {}]
  %s9 = inlined_call_operand.hbm [shape: f32[1,1], index: 9, kind: output, shape index: {}]
  %s10 = sld [smem:[#allocation0]]
  $region62: #{cada_global_forward.1} parent=0
    _
  %s12 = ssub.s32 1, %s10
  %s13 = scalar_select 0, %s12, %s10
  %14 = sst [smem:[#allocation2]] %s8
  $region1: #{cada_global_forward.1} parent=0
    #allocation3 [shape = 'u8[65536]{0}', space=vmem, size = 0x10000, scoped, tag = 'input window, operand 2, single buffered']
    #allocation4 [shape = 's32[1]{0}', space=sflag, size = 0x4, scoped, tag = 'scoped memory for cada_global_forward.1']
    #allocation5 [shape = 's32[1]{0}', space=sflag, size = 0x4, scoped, tag = 'scoped memory for cada_global_forward.1']
    #allocation6 [shape = 'u8[1024]{0}', space=vmem, size = 0x400, scoped, tag = 'input window, operand 3, single buffered']
    #allocation7 [shape = 's32[1]{0}', space=sflag, size = 0x4, scoped, tag = 'scoped memory for cada_global_forward.1']
    #allocation8 [shape = 'u8[65536]{0}', space=vmem, size = 0x10000, scoped, tag = 'input window, operand 4, single buffered']
    #allocation9 [shape = 'u8[1024]{0}', space=vmem, size = 0x400, scoped, tag = 'input window, operand 5, single buffered']
    #allocation10 [shape = 's32[1]{0}', space=sflag, size = 0x4, scoped, tag = 'scoped memory for cada_global_forward.1']
    #allocation11 [shape = 'u8[512]{0}', space=smem, size = 0x200, scoped, tag = 'output window, operand 0, single buffered']
    %15 = vsyncpa [#allocation4], 0
    %16 = vsyncpa [#allocation7], 0
    %17 = vsyncpa [#allocation10], 0
    %18 = vsyncpa [#allocation5], 0
    // Predicated region
    $region2: #{cada_global_forward.1} parent=1 // pred_check
      _
    $region3: #{cada_global_forward.1} parent=1 // pred_check_branch
      %20 = sbr.rel (0) target = $region5
    $region4: #{cada_global_forward.1} parent=1 // pred_region
      _
    $region5: #{cada_global_forward.1} parent=1 // pred_fallthru
      _
    // Predicated region
    $region6: #{cada_global_forward.1} parent=1 // pred_check
      _
    $region7: #{cada_global_forward.1} parent=1 // pred_check_branch
      %22 = sbr.rel (0) target = $region9
    $region8: #{cada_global_forward.1} parent=1 // pred_region
      _
    $region9: #{cada_global_forward.1} parent=1 // pred_fallthru
      _
    // Predicated region
    $region10: #{cada_global_forward.1} parent=1 // pred_check
      _
    $region11: #{cada_global_forward.1} parent=1 // pred_check_branch
      %24 = sbr.rel (0) target = $region13
    $region12: #{cada_global_forward.1} parent=1 // pred_region
      %26 = vsyncadd [#allocation4], 0
      %s27 = sshll.u32 %s2, 4
      %s28 = int_to_ptr.hbm [resolvable:$true] %s27
      %s29 = sshll.u32 [#allocation3], 4
      %s30 = int_to_ptr.vmem [resolvable:$true] %s29
      %35 = dma.hbm_to_vmem [thread:$0]  %s28, 2048, %s30, [#allocation4], 64, 64, 4
    $region13: #{cada_global_forward.1} parent=1 // pred_fallthru
      _
    // Predicated region
    $region14: #{cada_global_forward.1} parent=1 // pred_check
      _
    $region15: #{cada_global_forward.1} parent=1 // pred_check_branch
      %37 = sbr.rel (0) target = $region17
    $region16: #{cada_global_forward.1} parent=1 // pred_region
      %39 = vsyncadd [#allocation7], 0
      %s41 = sshll.u32 %s3, 4
      %s42 = int_to_ptr.hbm [resolvable:$true] %s41
      %s43 = sshll.u32 [#allocation6], 4
      %s44 = int_to_ptr.vmem [resolvable:$true] %s43
      %46 = dma.hbm_to_vmem [thread:$0]  %s42, 32, %s44, [#allocation7]
    $region17: #{cada_global_forward.1} parent=1 // pred_fallthru
      _
    // Predicated region
    $region18: #{cada_global_forward.1} parent=1 // pred_check
      _
    $region19: #{cada_global_forward.1} parent=1 // pred_check_branch
      %48 = sbr.rel (0) target = $region21
    $region20: #{cada_global_forward.1} parent=1 // pred_region
      %50 = vsyncadd [#allocation7], 0
      %s51 = sshll.u32 %s4, 4
      %s52 = int_to_ptr.hbm [resolvable:$true] %s51
      %s53 = sshll.u32 [#allocation8], 4
      %s54 = int_to_ptr.vmem [resolvable:$true] %s53
      %59 = dma.hbm_to_vmem [thread:$0]  %s52, 2048, %s54, [#allocation7], 64, 64, 4
    $region21: #{cada_global_forward.1} parent=1 // pred_fallthru
      _
    // Predicated region
    $region22: #{cada_global_forward.1} parent=1 // pred_check
      _
    $region23: #{cada_global_forward.1} parent=1 // pred_check_branch
      %61 = sbr.rel (0) target = $region25
    $region24: #{cada_global_forward.1} parent=1 // pred_region
      %63 = vsyncadd [#allocation10], 0
      %s65 = sshll.u32 %s5, 4
      %s66 = int_to_ptr.hbm [resolvable:$true] %s65
      %s67 = sshll.u32 [#allocation9], 4
      %s68 = int_to_ptr.vmem [resolvable:$true] %s67
      %70 = dma.hbm_to_vmem [thread:$0]  %s66, 32, %s68, [#allocation10]
    $region25: #{cada_global_forward.1} parent=1 // pred_fallthru
      _
    // Predicated region
    $region26: #{cada_global_forward.1} parent=1 // pred_check
      _
    $region27: #{cada_global_forward.1} parent=1 // pred_check_branch
      %72 = sbr.rel (0) target = $region29
    $region28: #{cada_global_forward.1} parent=1 // pred_region
      _
    $region29: #{cada_global_forward.1} parent=1 // pred_fallthru
      _
    // Predicated region
    $region30: #{cada_global_forward.1} parent=1 // pred_check
      _
    $region31: #{cada_global_forward.1} parent=1 // pred_check_branch
      %74 = sbr.rel (0) target = $region33
    $region32: #{cada_global_forward.1} parent=1 // pred_region
      _
    $region33: #{cada_global_forward.1} parent=1 // pred_fallthru
      _
    // Predicated region
    $region34: #{cada_global_forward.1} parent=1 // pred_check
      _
    $region35: #{cada_global_forward.1} parent=1 // pred_check_branch
      %76 = sbr.rel (0) target = $region37
    $region36: #{cada_global_forward.1} parent=1 // pred_region
      _
    $region37: #{cada_global_forward.1} parent=1 // pred_fallthru
      _
    // Predicated region
    $region38: #{cada_global_forward.1} parent=1 // pred_check
      _
    $region39: #{cada_global_forward.1} parent=1 // pred_check_branch
      %78 = sbr.rel (0) target = $region41
    $region40: #{cada_global_forward.1} parent=1 // pred_region
      %80 = dma.done [#allocation4], 2048
    $region41: #{cada_global_forward.1} parent=1 // pred_fallthru
      _
    // Predicated region
    $region42: #{cada_global_forward.1} parent=1 // pred_check
      _
    $region43: #{cada_global_forward.1} parent=1 // pred_check_branch
      %82 = sbr.rel (0) target = $region45
    $region44: #{cada_global_forward.1} parent=1 // pred_region
      %84 = dma.done [#allocation7], 32
    $region45: #{cada_global_forward.1} parent=1 // pred_fallthru
      _
    // Predicated region
    $region46: #{cada_global_forward.1} parent=1 // pred_check
      _
    $region47: #{cada_global_forward.1} parent=1 // pred_check_branch
      %86 = sbr.rel (0) target = $region49
    $region48: #{cada_global_forward.1} parent=1 // pred_region
      %88 = dma.done [#allocation7], 2048
    $region49: #{cada_global_forward.1} parent=1 // pred_fallthru
      _
    // Predicated region
    $region50: #{cada_global_forward.1} parent=1 // pred_check
      _
    $region51: #{cada_global_forward.1} parent=1 // pred_check_branch
      %90 = sbr.rel (0) target = $region53
    $region52: #{cada_global_forward.1} parent=1 // pred_region
      %92 = dma.done [#allocation10], 32
    $region53: #{cada_global_forward.1} parent=1 // pred_fallthru
      _
    %v94 = vld [vmem:[%s0] sm:$0xff]
    %v95 = vpack.c.bf16 %v94, %v94
    %v96 = vld [vmem:[#allocation3] sm:$0xf]
    %v97 = vld [vmem:[#allocation3 + $0x4] sm:$0xf]
    %v98 = vld [vmem:[#allocation3 + $0x8] sm:$0xf]
    %v99 = vld [vmem:[#allocation3 + $0xc] sm:$0xf]
    %v100 = vld [vmem:[#allocation3 + $0x10] sm:$0xf]
    %v101 = vld [vmem:[#allocation3 + $0x14] sm:$0xf]
    %v102 = vld [vmem:[#allocation3 + $0x18] sm:$0xf]
    %v103 = vld [vmem:[#allocation3 + $0x1c] sm:$0xf]
    %v104 = vld [vmem:[#allocation3 + $0x20] sm:$0xf]
    %v105 = vld [vmem:[#allocation3 + $0x24] sm:$0xf]
    %v106 = vld [vmem:[#allocation3 + $0x28] sm:$0xf]
    %v107 = vld [vmem:[#allocation3 + $0x2c] sm:$0xf]
    %v108 = vld [vmem:[#allocation3 + $0x30] sm:$0xf]
    %v109 = vld [vmem:[#allocation3 + $0x34] sm:$0xf]
    %v110 = vld [vmem:[#allocation3 + $0x38] sm:$0xf]
    %v111 = vld [vmem:[#allocation3 + $0x3c] sm:$0xf]
    %v112 = vld [vmem:[#allocation3 + $0x40] sm:$0xf]
    %v113 = vld [vmem:[#allocation3 + $0x44] sm:$0xf]
    %v114 = vld [vmem:[#allocation3 + $0x48] sm:$0xf]
    %v115 = vld [vmem:[#allocation3 + $0x4c] sm:$0xf]
    %v116 = vld [vmem:[#allocation3 + $0x50] sm:$0xf]
    %v117 = vld [vmem:[#allocation3 + $0x54] sm:$0xf]
    %v118 = vld [vmem:[#allocation3 + $0x58] sm:$0xf]
    %v119 = vld [vmem:[#allocation3 + $0x5c] sm:$0xf]
    %v120 = vld [vmem:[#allocation3 + $0x60] sm:$0xf]
    %v121 = vld [vmem:[#allocation3 + $0x64] sm:$0xf]
    %v122 = vld [vmem:[#allocation3 + $0x68] sm:$0xf]
    %v123 = vld [vmem:[#allocation3 + $0x6c] sm:$0xf]
    %v124 = vld [vmem:[#allocation3 + $0x70] sm:$0xf]
    %v125 = vld [vmem:[#allocation3 + $0x74] sm:$0xf]
    %v126 = vld [vmem:[#allocation3 + $0x78] sm:$0xf]
    %v127 = vld [vmem:[#allocation3 + $0x7c] sm:$0xf]
    %v128 = vld [vmem:[#allocation6] sm:$0x3]
    %v130 = vperm.slane %v128, 0
    %v131 = vperm.slane %v128, 1
    %v166 = vunpack.c.l.b16 %v96
    %v167 = vunpack.c.l.b16 %v97
    %v168 = vunpack.c.l.b16 %v98
    %v169 = vunpack.c.l.b16 %v99
    %v170 = vunpack.c.l.b16 %v100
    %v171 = vunpack.c.l.b16 %v101
    %v172 = vunpack.c.l.b16 %v102
    %v173 = vunpack.c.l.b16 %v103
    %v174 = vunpack.c.l.b16 %v104
    %v175 = vunpack.c.l.b16 %v105
    %v176 = vunpack.c.l.b16 %v106
    %v177 = vunpack.c.l.b16 %v107
    %v178 = vunpack.c.l.b16 %v108
    %v179 = vunpack.c.l.b16 %v109
    %v180 = vunpack.c.l.b16 %v110
    %v181 = vunpack.c.l.b16 %v111
    %v182 = vunpack.c.l.b16 %v112
    %v183 = vunpack.c.l.b16 %v113
    %v184 = vunpack.c.l.b16 %v114
    %v185 = vunpack.c.l.b16 %v115
    %v186 = vunpack.c.l.b16 %v116
    %v187 = vunpack.c.l.b16 %v117
    %v188 = vunpack.c.l.b16 %v118
    %v189 = vunpack.c.l.b16 %v119
    %v190 = vunpack.c.l.b16 %v120
    %v191 = vunpack.c.l.b16 %v121
    %v192 = vunpack.c.l.b16 %v122
    %v193 = vunpack.c.l.b16 %v123
    %v194 = vunpack.c.l.b16 %v124
    %v195 = vunpack.c.l.b16 %v125
    %v196 = vunpack.c.l.b16 %v126
    %v197 = vunpack.c.l.b16 %v127
    %v198 = vpack.c.b16 %v167, %v166
    %v199 = vpack.c.b16 %v169, %v168
    %v200 = vpack.c.b16 %v171, %v170
    %v201 = vpack.c.b16 %v173, %v172
    %v202 = vpack.c.b16 %v175, %v174
    %v203 = vpack.c.b16 %v177, %v176
    %v204 = vpack.c.b16 %v179, %v178
    %v205 = vpack.c.b16 %v181, %v180
    %v206 = vpack.c.b16 %v183, %v182
    %v207 = vpack.c.b16 %v185, %v184
    %v208 = vpack.c.b16 %v187, %v186
    %v209 = vpack.c.b16 %v189, %v188
    %v210 = vpack.c.b16 %v191, %v190
    %v211 = vpack.c.b16 %v193, %v192
    %v212 = vpack.c.b16 %v195, %v194
    %v213 = vpack.c.b16 %v197, %v196
    %230 = vmatpush.bf16.xpose.msra.mxu0 %v205
    %231 = vmatpush.bf16.xpose.msra.mxu0 %v204
    %232 = vmatpush.bf16.xpose.msra.mxu0 %v203
    %233 = vmatpush.bf16.xpose.msra.mxu0 %v202
    %234 = vmatpush.bf16.xpose.msra.mxu0 %v201
    %235 = vmatpush.bf16.xpose.msra.mxu0 %v200
    %236 = vmatpush.bf16.xpose.msra.mxu0 %v199
    %237 = vmatpush.bf16.xpose.msra.mxu0 %v198
    %238 = vmatmul.bf16.gmra.mxu0 %v95
    %v239 = vpop.f32.mrf.mxu0
    %v240 = vadd.f32 %v130, %v239
    %v241 = vpop.f32.mrf.mxu0
    %242 = vdwg.mxu0
    %243 = vmatpush.bf16.xpose.msra.mxu0 %v213
    %244 = vmatpush.bf16.xpose.msra.mxu0 %v212
    %245 = vmatpush.bf16.xpose.msra.mxu0 %v211
    %246 = vmatpush.bf16.xpose.msra.mxu0 %v210
    %247 = vmatpush.bf16.xpose.msra.mxu0 %v209
    %248 = vmatpush.bf16.xpose.msra.mxu0 %v208
    %249 = vmatpush.bf16.xpose.msra.mxu0 %v207
    %250 = vmatpush.bf16.xpose.msra.mxu0 %v206
    %251 = vmatmul.bf16.gmra.mxu0 %v95
    %v252 = vpop.f32.mrf.mxu0
    %v253 = vadd.f32 %v131, %v252
    %v254 = vpop.f32.mrf.mxu0
    %255 = vdwg.mxu0
    %v256 = vld [vmem:[%s1] sm:$0xff]
    %v257 = vpack.c.bf16 %v256, %v256
    %v258 = vld [vmem:[#allocation8] sm:$0xf]
    %v259 = vld [vmem:[#allocation8 + $0x4] sm:$0xf]
    %v260 = vld [vmem:[#allocation8 + $0x8] sm:$0xf]
    %v261 = vld [vmem:[#allocation8 + $0xc] sm:$0xf]
    %v262 = vld [vmem:[#allocation8 + $0x10] sm:$0xf]
    %v263 = vld [vmem:[#allocation8 + $0x14] sm:$0xf]
    %v264 = vld [vmem:[#allocation8 + $0x18] sm:$0xf]
    %v265 = vld [vmem:[#allocation8 + $0x1c] sm:$0xf]
    %v266 = vld [vmem:[#allocation8 + $0x20] sm:$0xf]
    %v267 = vld [vmem:[#allocation8 + $0x24] sm:$0xf]
    %v268 = vld [vmem:[#allocation8 + $0x28] sm:$0xf]
    %v269 = vld [vmem:[#allocation8 + $0x2c] sm:$0xf]
    %v270 = vld [vmem:[#allocation8 + $0x30] sm:$0xf]
    %v271 = vld [vmem:[#allocation8 + $0x34] sm:$0xf]
    %v272 = vld [vmem:[#allocation8 + $0x38] sm:$0xf]
    %v273 = vld [vmem:[#allocation8 + $0x3c] sm:$0xf]
    %v274 = vld [vmem:[#allocation8 + $0x40] sm:$0xf]
    %v275 = vld [vmem:[#allocation8 + $0x44] sm:$0xf]
    %v276 = vld [vmem:[#allocation8 + $0x48] sm:$0xf]
    %v277 = vld [vmem:[#allocation8 + $0x4c] sm:$0xf]
    %v278 = vld [vmem:[#allocation8 + $0x50] sm:$0xf]
    %v279 = vld [vmem:[#allocation8 + $0x54] sm:$0xf]
    %v280 = vld [vmem:[#allocation8 + $0x58] sm:$0xf]
    %v281 = vld [vmem:[#allocation8 + $0x5c] sm:$0xf]
    %v282 = vld [vmem:[#allocation8 + $0x60] sm:$0xf]
    %v283 = vld [vmem:[#allocation8 + $0x64] sm:$0xf]
    %v284 = vld [vmem:[#allocation8 + $0x68] sm:$0xf]
    %v285 = vld [vmem:[#allocation8 + $0x6c] sm:$0xf]
    %v286 = vld [vmem:[#allocation8 + $0x70] sm:$0xf]
    %v287 = vld [vmem:[#allocation8 + $0x74] sm:$0xf]
    %v288 = vld [vmem:[#allocation8 + $0x78] sm:$0xf]
    %v289 = vld [vmem:[#allocation8 + $0x7c] sm:$0xf]
    %v290 = vld [vmem:[#allocation9] sm:$0x3]
    %v292 = vperm.slane %v290, 0
    %v293 = vperm.slane %v290, 1
    %v328 = vunpack.c.l.b16 %v258
    %v329 = vunpack.c.l.b16 %v259
    %v330 = vunpack.c.l.b16 %v260
    %v331 = vunpack.c.l.b16 %v261
    %v332 = vunpack.c.l.b16 %v262
    %v333 = vunpack.c.l.b16 %v263
    %v334 = vunpack.c.l.b16 %v264
    %v335 = vunpack.c.l.b16 %v265
    %v336 = vunpack.c.l.b16 %v266
    %v337 = vunpack.c.l.b16 %v267
    %v338 = vunpack.c.l.b16 %v268
    %v339 = vunpack.c.l.b16 %v269
    %v340 = vunpack.c.l.b16 %v270
    %v341 = vunpack.c.l.b16 %v271
    %v342 = vunpack.c.l.b16 %v272
    %v343 = vunpack.c.l.b16 %v273
    %v344 = vunpack.c.l.b16 %v274
    %v345 = vunpack.c.l.b16 %v275
    %v346 = vunpack.c.l.b16 %v276
    %v347 = vunpack.c.l.b16 %v277
    %v348 = vunpack.c.l.b16 %v278
    %v349 = vunpack.c.l.b16 %v279
    %v350 = vunpack.c.l.b16 %v280
    %v351 = vunpack.c.l.b16 %v281
    %v352 = vunpack.c.l.b16 %v282
    %v353 = vunpack.c.l.b16 %v283
    %v354 = vunpack.c.l.b16 %v284
    %v355 = vunpack.c.l.b16 %v285
    %v356 = vunpack.c.l.b16 %v286
    %v357 = vunpack.c.l.b16 %v287
    %v358 = vunpack.c.l.b16 %v288
    %v359 = vunpack.c.l.b16 %v289
    %v360 = vpack.c.b16 %v329, %v328
    %v361 = vpack.c.b16 %v331, %v330
    %v362 = vpack.c.b16 %v333, %v332
    %v363 = vpack.c.b16 %v335, %v334
    %v364 = vpack.c.b16 %v337, %v336
    %v365 = vpack.c.b16 %v339, %v338
    %v366 = vpack.c.b16 %v341, %v340
    %v367 = vpack.c.b16 %v343, %v342
    %v368 = vpack.c.b16 %v345, %v344
    %v369 = vpack.c.b16 %v347, %v346
    %v370 = vpack.c.b16 %v349, %v348
    %v371 = vpack.c.b16 %v351, %v350
    %v372 = vpack.c.b16 %v353, %v352
    %v373 = vpack.c.b16 %v355, %v354
    %v374 = vpack.c.b16 %v357, %v356
    %v375 = vpack.c.b16 %v359, %v358
    %392 = vmatpush.bf16.xpose.msra.mxu0 %v367
    %393 = vmatpush.bf16.xpose.msra.mxu0 %v366
    %394 = vmatpush.bf16.xpose.msra.mxu0 %v365
    %395 = vmatpush.bf16.xpose.msra.mxu0 %v364
    %396 = vmatpush.bf16.xpose.msra.mxu0 %v363
    %397 = vmatpush.bf16.xpose.msra.mxu0 %v362
    %398 = vmatpush.bf16.xpose.msra.mxu0 %v361
    %399 = vmatpush.bf16.xpose.msra.mxu0 %v360
    %400 = vmatmul.bf16.gmra.mxu0 %v257
    %v401 = vpop.f32.mrf.mxu0
    %v402 = vadd.f32 %v292, %v401
    %v403 = vpop.f32.mrf.mxu0
    %404 = vdwg.mxu0
    %405 = vmatpush.bf16.xpose.msra.mxu0 %v375
    %406 = vmatpush.bf16.xpose.msra.mxu0 %v374
    %407 = vmatpush.bf16.xpose.msra.mxu0 %v373
    %408 = vmatpush.bf16.xpose.msra.mxu0 %v372
    %409 = vmatpush.bf16.xpose.msra.mxu0 %v371
    %410 = vmatpush.bf16.xpose.msra.mxu0 %v370
    %411 = vmatpush.bf16.xpose.msra.mxu0 %v369
    %412 = vmatpush.bf16.xpose.msra.mxu0 %v368
    %413 = vmatmul.bf16.gmra.mxu0 %v257
    %v414 = vpop.f32.mrf.mxu0
    %v415 = vadd.f32 %v293, %v414
    %v416 = vpop.f32.mrf.mxu0
    %417 = vdwg.mxu0
    %s418 = sld [smem:[#allocation2]]
    %v419 = vmul.f32 %v240, %v240
    %v420 = vmul.f32 %v253, %v253
    %v421 = vadd.f32 %v419, %v420
    %422 = vadd.xlane.f32.xlu0 %v421
    %v423 = vpop.xlane.xlu0 %422
    %v424 = vadd.f32 %v423, 1e-12
    %v425 = vrsqrt.pop %v424
    %v426 = vmul.f32 %v425, %v424
    %v427 = vmul.f32 %v426, %v425
    %v428 = vmul.f32 0.5, %v427
    %v429 = vsub.f32 1.5, %v428
    %v430 = vmul.f32 %v425, %v429
    %vm431 = vweird.f32 %v424
    %vm432 = vweird.f32 %v425
    %vm433 = vmor %vm431, %vm432
    %v434 = vsel %vm433, %v425, %v430
    %v435 = vstv %s418
    %v436 = vmul.f32 %v435, %v434
    %v437 = vmul.f32 %v240, %v436
    %v438 = vmul.f32 %v253, %v436
    %v439 = vmul.f32 %v402, %v402
    %v440 = vmul.f32 %v415, %v415
    %v441 = vadd.f32 %v439, %v440
    %442 = vadd.xlane.f32.xlu0 %v441
    %v443 = vpop.xlane.xlu0 %442
    %v444 = vadd.f32 %v443, 1e-12
    %v445 = vrsqrt.pop %v444
    %v446 = vmul.f32 %v445, %v444
    %v447 = vmul.f32 %v446, %v445
    %v448 = vmul.f32 0.5, %v447
    %v449 = vsub.f32 1.5, %v448
    %v450 = vmul.f32 %v445, %v449
    %vm451 = vweird.f32 %v444
    %vm452 = vweird.f32 %v445
    %vm453 = vmor %vm451, %vm452
    %v454 = vsel %vm453, %v445, %v450
    %v455 = vmul.f32 %v402, %v454
    %v456 = vmul.f32 %v415, %v454
    %v457 = vpack.c.bf16 %v437, %v437
    %v458 = vpack.c.bf16 %v438, %v438
    %v459 = vpack.c.bf16 %v455, %v455
    %v460 = vpack.c.bf16 %v456, %v456
    %461 = vmatpush.bf16.xpose.msra.mxu0 0
    %462 = vmatpush.bf16.xpose.msra.mxu0 0
    %463 = vmatpush.bf16.xpose.msra.mxu0 0
    %464 = vmatpush.bf16.xpose.msra.mxu0 0
    %465 = vmatpush.bf16.xpose.msra.mxu0 0
    %466 = vmatpush.bf16.xpose.msra.mxu0 0
    %467 = vmatpush.bf16.xpose.msra.mxu0 0
    %468 = vmatpush.bf16.xpose.msra.mxu0 %v459
    %469 = vmatmul.bf16.gmra.mxu0 %v457
    %v470 = vpop.f32.mrf.mxu0
    %v471 = vadd.f32 0.0, %v470
    %v472 = vpop.f32.mrf.mxu0
    %473 = vdwg.mxu0
    %474 = vmatpush.bf16.xpose.msra.mxu0 0
    %475 = vmatpush.bf16.xpose.msra.mxu0 0
    %476 = vmatpush.bf16.xpose.msra.mxu0 0
    %477 = vmatpush.bf16.xpose.msra.mxu0 0
    %478 = vmatpush.bf16.xpose.msra.mxu0 0
    %479 = vmatpush.bf16.xpose.msra.mxu0 0
    %480 = vmatpush.bf16.xpose.msra.mxu0 0
    %481 = vmatpush.bf16.xpose.msra.mxu0 %v460
    %482 = vmatmul.bf16.gmra.mxu0 %v458
    %v483 = vpop.f32.mrf.mxu0
    %v484 = vadd.f32 %v471, %v483
    %v485 = vpop.f32.mrf.mxu0
    %486 = vdwg.mxu0
    %v487 = vld [vmem:[%s6] sm:$0x1]
    %v488 = vld [vmem:[%s7] sm:$0xff]
    %v489 = vperm.slane %v487, 0
    %490 = vset.pattern.permute.xlu0 0
    %491 = vperm.xlu0 %490, %v488
    %v492 = vpop.permute.xlu0 %491
    %vm493 = vcmp.eq.s32.totalorder %v489, %v492
    %v494 = vsel %vm493, 1, 0
    %v495 = vcvt.s32.f32 %v494
    %vm496 = vcmask 64512
    %v497 = vsel %vm496, %v495, 0.0
    %498 = vadd.xlane.f32.xlu0 %v497
    %v499 = vpop.xlane.xlu0 %498
    %v500 = vrcp.pop %v499
    %v501 = vmul.f32 %v499, %v500
    %v502 = vsub.f32 1.0, %v501
    %v503 = vmul.f32 %v500, %v502
    %v504 = vadd.f32 %v500, %v503
    %vm505 = vweird.f32 %v499
    %vm506 = vweird.f32 %v500
    %vm507 = vmor %vm505, %vm506
    %v508 = vsel %vm507, %v500, %v504
    %v509 = vand.u32 2147483647, %v499
    %vm510 = vcmp.eq.f32.partialorder %v509, 8.507059e+37
    %v511 = vand.u32 %v499, 2147483648
    %v512 = vor.u32 1.1754944e-38, %v511
    %v513 = vsel %vm510, %v512, %v508
    %v514 = vmul.f32 1.0, %v513
    %v515 = vmul.f32 %v495, %v514
    %v516 = vadd.f32 %v514, 1e-08
    %v517 = vlog2.pop %v516
    %v518 = vmul.f32 %v517, 0.6931472
    %v519 = vsel %vm493, %v518, -18.420681
    %v520 = vsel %vm496, %v484, -inf
    %521 = vmax.xlane.f32.xlu0 %v520
    %v522 = vpop.xlane.xlu0 %521
    %v523 = vsub.f32 %v484, %v522
    %v524 = vmul.f32 %v523, 1.442695
    %v525 = vpow.pop %v524
    %v526 = vsel %vm496, %v525, 0.0
    %527 = vadd.xlane.f32.xlu0 %v526
    %v528 = vpop.xlane.xlu0 %527
    %v529 = vlog2.pop %v528
    %v530 = vmul.f32 %v529, 0.6931472
    %v531 = vsub.f32 %v523, %v530
    %v532 = vrcp.pop %v528
    %v533 = vmul.f32 %v525, %v532
    %v534 = vrot.slane %v520, 4
    %v535 = vmax.f32 %v520, %v534
    %v536 = vrot.slane %v535, 2
    %v537 = vmax.f32 %v535, %v536
    %v538 = vrot.slane %v537, 1
    %v539 = vmax.f32 %v537, %v538
    %v540 = vsub.f32 %v484, %v539
    %v541 = vmul.f32 %v540, 1.442695
    %v542 = vpow.pop %v541
    %v543 = vsel %vm496, %v542, 0.0
    %v544 = vrot.slane %v543, 4
    %v545 = vadd.f32 %v543, %v544
    %v546 = vrot.slane %v545, 2
    %v547 = vadd.f32 %v545, %v546
    %v548 = vrot.slane %v547, 1
    %v549 = vadd.f32 %v547, %v548
    %v550 = vlog2.pop %v549
    %v551 = vmul.f32 %v550, 0.6931472
    %v552 = vsub.f32 %v540, %v551
    %v553 = vrcp.pop %v549
    %v554 = vmul.f32 %v542, %v553
    %v555 = vmul.f32 %v515, %v531
    %v556 = vsel %vm496, %v555, 0.0
    %557 = vadd.xlane.f32.xlu0 %v556
    %v558 = vpop.xlane.xlu0 %557
    %v559 = vrot.slane %v558, 4
    %v560 = vadd.f32 %v558, %v559
    %v561 = vrot.slane %v560, 2
    %v562 = vadd.f32 %v560, %v561
    %v563 = vrot.slane %v562, 1
    %v564 = vadd.f32 %v562, %v563
    %s565 = vtos %v564
    %s566 = ssub.f32 0.0, %s565
    %s567 = smul.f32 %s566, 0.125
    %v568 = vmul.f32 %v515, %v552
    %v569 = vsel %vm496, %v568, 0.0
    %570 = vadd.xlane.f32.xlu0 %v569
    %v571 = vpop.xlane.xlu0 %570
    %v572 = vrot.slane %v571, 4
    %v573 = vadd.f32 %v571, %v572
    %v574 = vrot.slane %v573, 2
    %v575 = vadd.f32 %v573, %v574
    %v576 = vrot.slane %v575, 1
    %v577 = vadd.f32 %v575, %v576
    %s578 = vtos %v577
    %s579 = ssub.f32 0.0, %s578
    %s580 = smul.f32 %s579, 0.125
    %v581 = vsub.f32 %v531, %v519
    %v582 = vmul.f32 %v533, %v581
    %v583 = vsub.f32 %v519, %v531
    %v584 = vmul.f32 %v515, %v583
    %v585 = vadd.f32 %v582, %v584
    %v586 = vsel %vm496, %v585, 0.0
    %587 = vadd.xlane.f32.xlu0 %v586
    %v588 = vpop.xlane.xlu0 %587
    %v589 = vrot.slane %v588, 4
    %v590 = vadd.f32 %v588, %v589
    %v591 = vrot.slane %v590, 2
    %v592 = vadd.f32 %v590, %v591
    %v593 = vrot.slane %v592, 1
    %v594 = vadd.f32 %v592, %v593
    %s595 = vtos %v594
    %v596 = vrcp.pop 64.0
    %v597 = vmul.f32 64.0, %v596
    %v598 = vsub.f32 1.0, %v597
    %v599 = vmul.f32 %v596, %v598
    %v600 = vadd.f32 %v596, %v599
    %vm601 = vweird.f32 %v596
    %v602 = vsel %vm601, %v596, %v600
    %s603 = vtos %v602
    %s604 = smul.f32 %s595, %s603
    %s605 = sadd.f32 %s604, %s567
    %v606 = vsub.f32 %v552, %v519
    %v607 = vmul.f32 %v554, %v606
    %v608 = vsub.f32 %v519, %v552
    %v609 = vmul.f32 %v515, %v608
    %v610 = vadd.f32 %v607, %v609
    %v611 = vsel %vm496, %v610, 0.0
    %612 = vadd.xlane.f32.xlu0 %v611
    %v613 = vpop.xlane.xlu0 %612
    %v614 = vrot.slane %v613, 4
    %v615 = vadd.f32 %v613, %v614
    %v616 = vrot.slane %v615, 2
    %v617 = vadd.f32 %v615, %v616
    %v618 = vrot.slane %v617, 1
    %v619 = vadd.f32 %v617, %v618
    %s620 = vtos %v619
    %v621 = vrcp.pop 64.0
    %v622 = vmul.f32 64.0, %v621
    %v623 = vsub.f32 1.0, %v622
    %v624 = vmul.f32 %v621, %v623
    %v625 = vadd.f32 %v621, %v624
    %vm626 = vweird.f32 %v621
    %v627 = vsel %vm626, %v621, %v625
    %s628 = vtos %v627
    %s629 = smul.f32 %s620, %s628
    %s630 = sadd.f32 %s629, %s580
    %s631 = sadd.f32 %s605, %s630
    %s632 = smul.f32 %s631, 0.5
    %s633 = scalar_lea.smem [#allocation11], 0
    %634 = sst [smem:[%s633]] %s632
    // Predicated region
    $region54: #{cada_global_forward.1} parent=1 // pred_check
      _
    $region55: #{cada_global_forward.1} parent=1 // pred_check_branch
      %636 = sbr.rel (0) target = $region57
    $region56: #{cada_global_forward.1} parent=1 // pred_region
      %638 = vsyncadd [#allocation5], 0
      %s640 = sshll.u32 %s9, 4
      %s641 = int_to_ptr.hbm [resolvable:$true] %s640
      %643 = dma.smem_to_hbm [#allocation11], 16, %s641, [#allocation5]
    $region57: #{cada_global_forward.1} parent=1 // pred_fallthru
      _
    // Predicated region
    $region58: #{cada_global_forward.1} parent=1 // pred_check
      _
    $region59: #{cada_global_forward.1} parent=1 // pred_check_branch
      %645 = sbr.rel (0) target = $region61
    $region60: #{cada_global_forward.1} parent=1 // pred_region
      %647 = dma.done [#allocation5], 16
    $region61: #{cada_global_forward.1} parent=1 // pred_fallthru
      _
    %648 = sfence
    %649 = vsyncpa [#allocation4], 1
    %650 = vsyncpa [#allocation7], 1
    %651 = vsyncpa [#allocation10], 1
    %652 = vsyncpa [#allocation5], 1

</llo_original>
